<compile_context>
chip_gen: v6e
topology: v6e:2x2x1
jax: 0.10.0
libtpu: 0.0.40
codegen_flags: <defaults>
</compile_context>

<pallas_src>
import functools

import jax
import jax.numpy as jnp
from jax.experimental import pallas as pl
from jax.experimental.pallas import tpu as pltpu


def _gat_last_kernel(adj_ref, x_ref, w_ref, out_ref, *, n_total):
    """One grid step == one row tile of the output.

    adj_ref: (R, N)   dense adjacency row tile (f32 edge counts)
    x_ref:   (N, Cp)  node features, channel axis zero-padded to 128 lanes
    w_ref:   (Cp, Cp) mean-over-heads weight, pre-transposed + zero-padded
    out_ref: (R, Cp)  lane-dense output tile (padded channels stay zero)
    """
    # Mean-over-heads value projection: one lane-dense MXU matmul instead of H
    # tiny (N,8)x(8,8) pushes.  Recomputed per row tile; O(N*Cp^2) is negligible
    # next to the (R,N)@(N,Cp) aggregation below.
    value = jnp.dot(x_ref[...], w_ref[...], preferred_element_type=jnp.float32)

    # Head-independent attention: softmax of a row-constant masked scalar is
    # simply mask / degree (uniform 1/N for isolated rows).  No exp, no
    # per-head recompute.  Exact division keeps bit-tight parity with the
    # reference softmax (p/sum with p == 1).
    mask = (adj_ref[...] != 0).astype(jnp.float32)              # (R, N)
    deg = jnp.sum(mask, axis=-1, keepdims=True)                 # (R, 1)
    num = jnp.where(deg > 0, mask, 1.0)                         # isolated -> uniform
    inv = 1.0 / jnp.where(deg > 0, deg, jnp.float32(n_total))   # (R, 1)
    att = num * inv                                             # (R, N)

    # TODO(synk): for production-scale N, cast att/value to bf16 here (keeping
    # preferred_element_type=f32 accumulation) to reach MXU bf16 peak on
    # v5e/v6e/v7x; kept f32 so the demo validates at tight tolerance.
    out_ref[...] = jnp.dot(att, value, preferred_element_type=jnp.float32)


def _pick_row_tile(n, adj_bytes_budget=12 << 20):
    """Row-tile size for streaming the (n, n) adjacency.

    Largest multiple of 8 that divides n and whose double-buffered f32 slab
    (2 * r * n * 4 bytes) stays under a budget safe for the scoped-VMEM
    defaults of v5e (16 MiB), v6e (32 MiB) and v7x (32 MiB of 64 MiB physical).
    Small graphs use a single full tile.
    """
    cap = max(8, adj_bytes_budget // (2 * 4 * n))
    if n <= cap:
        return n
    r = (min(cap, n) // 8) * 8
    while r >= 8:
        if n % r == 0:
            return r
        r -= 8
    return n  # no aligned divisor; fall back to a single (untiled) row block


def gat_last_layer(x, edge_index, linear_weight, query_weight, key_weight,
                   *, num_nodes, leakyrelu_slope=0.2):
    """Pallas implementation of GATLastLayer.forward.

    query_weight / key_weight / leakyrelu_slope are accepted for API parity but
    mathematically cannot influence the output (see module docstring); they are
    therefore not shipped to the kernel.
    """
    num_heads, c_in, c_out = linear_weight.shape
    assert c_in == c_out, "original torch matmul requires in_channels == out_channels"
    n = num_nodes

    # to_dense_adj (glue, not hot path): dense (N, N) adjacency with edge counts.
    src, dst = edge_index[0], edge_index[1]
    adj = jnp.zeros((n, n), jnp.float32).at[src, dst].add(1.0)

    # value_mean = x @ mean_h(W_h)^T  -> pre-transpose the mean weight so the
    # kernel does a plain row-major (N,Cp)@(Cp,Cp) matmul.
    w_mean_t = jnp.mean(linear_weight.astype(jnp.float32), axis=0).T   # (c_in, c_out)

    # Lane-dense padding of the channel axes to a multiple of 128: unmasked
    # stores and full MXU output columns instead of 8/128-lane partial ops.
    c_pad = max(128, ((c_out + 127) // 128) * 128)
    x_p = jnp.zeros((n, c_pad), jnp.float32).at[:, :c_in].set(x.astype(jnp.float32))
    w_p = jnp.zeros((c_pad, c_pad), jnp.float32).at[:c_in, :c_out].set(w_mean_t)

    r = _pick_row_tile(n)
    grid = (n // r,)
    kernel = functools.partial(_gat_last_kernel, n_total=n)

    out_p = pl.pallas_call(
        kernel,
        out_shape=jax.ShapeDtypeStruct((n, c_pad), jnp.float32),
        grid_spec=pltpu.PrefetchScalarGridSpec(
            num_scalar_prefetch=0,
            grid=grid,
            in_specs=[
                pl.BlockSpec((r, n), lambda i: (i, 0)),          # adjacency row tile
                pl.BlockSpec((n, c_pad), lambda i: (0, 0)),      # x (resident)
                pl.BlockSpec((c_pad, c_pad), lambda i: (0, 0)),  # mean weight (resident)
            ],
            out_specs=pl.BlockSpec((r, c_pad), lambda i: (i, 0)),
        ),
        compiler_params=pltpu.CompilerParams(
            # Row tiles are independent -> shard across both TensorCores on v7x.
            dimension_semantics=("parallel",),
            vmem_limit_bytes=32 * 1024 * 1024,
        ),
    )(adj, x_p, w_p)
    return out_p[:, :c_out]


def _reference(x, edge_index, linear_weight, query_weight, key_weight,
               *, num_nodes, leakyrelu_slope=0.2):
    """Pure-JAX literal transcription of the torch forward, for validation."""
    n = num_nodes
    src, dst = edge_index[0], edge_index[1]
    adj = jnp.zeros((1, n, n), jnp.float32).at[0, src, dst].add(1.0)

    lin = jnp.matmul(linear_weight, x.T[None])                    # (H, C, N)
    q = jnp.matmul(query_weight, lin)                             # (H, 1, N)
    k = jnp.matmul(key_weight, lin)                               # (H, 1, N)
    value = jnp.swapaxes(lin, 1, 2)                               # (H, N, C)
    att = jnp.matmul(q, jnp.swapaxes(k, 1, 2))                    # (H, 1, 1)
    att = jnp.where(att >= 0, att, leakyrelu_slope * att)         # LeakyReLU
    att = jnp.where(adj != 0, att, jnp.float32(-1.0e9))           # (H, N, N)
    att = jax.nn.softmax(att, axis=2)
    out = jnp.matmul(att, value)                                  # (H, N, C)
    return jnp.mean(out, axis=0)                                  # (N, C)


if __name__ == "__main__":
    NUM_NODES = 16
    NUM_HEADS = 4
    IN_CHANNELS = OUT_CHANNELS = 8   # torch code requires in == out

    key = jax.random.PRNGKey(0)
    kx, kw, kq, kk = jax.random.split(key, 4)
    x = jax.random.normal(kx, (NUM_NODES, IN_CHANNELS), jnp.float32)
    linear_weight = jax.random.normal(kw, (NUM_HEADS, IN_CHANNELS, OUT_CHANNELS), jnp.float32)
    query_weight = jax.random.normal(kq, (NUM_HEADS, 1, OUT_CHANNELS), jnp.float32)
    key_weight = jax.random.normal(kk, (NUM_HEADS, 1, OUT_CHANNELS), jnp.float32)

    # Deterministic graph: bidirectional ring over the first 15 nodes; node 15
    # is left isolated to exercise the all-masked-row (uniform 1/N) path.
    ring = jnp.arange(NUM_NODES - 1, dtype=jnp.int32)
    src = jnp.concatenate([ring, (ring + 1) % (NUM_NODES - 1)])
    dst = jnp.concatenate([(ring + 1) % (NUM_NODES - 1), ring])
    edge_index = jnp.stack([src, dst])                             # (2, 30)

    out = gat_last_layer(x, edge_index, linear_weight, query_weight, key_weight,
                         num_nodes=NUM_NODES, leakyrelu_slope=0.2)
    out = jax.block_until_ready(out)

    ref = _reference(x, edge_index, linear_weight, query_weight, key_weight,
                     num_nodes=NUM_NODES, leakyrelu_slope=0.2)
    assert out.shape == (NUM_NODES, OUT_CHANNELS)
    assert jnp.allclose(out, ref, atol=1e-4, rtol=1e-4), "mismatch vs reference"

    print("KERNEL_OK")
</pallas_src>

<mosaic_0001>
module attributes {stable_mosaic.version = 11 : i64} {
  func.func @_gat_last_kernel(%arg0: i32, %arg1: memref<16x16xf32, #tpu.memory_space<vmem>>, %arg2: memref<16x128xf32, #tpu.memory_space<vmem>>, %arg3: memref<128x128xf32, #tpu.memory_space<vmem>>, %arg4: memref<16x128xf32, #tpu.memory_space<vmem>>) attributes {dimension_semantics = [#tpu.dimension_semantics<parallel>], iteration_bounds = array<i64: 1>, scalar_prefetch = 0 : i64, scratch_operands = 0 : i64, tpu.core_type = #tpu.core_type<tc>, window_params = [{transform_indices = @transform_0, window_bounds = array<i64: 16, 16>}, {pipeline_mode = #tpu.pipeline_mode<synchronous>, transform_indices = @transform_1, window_bounds = array<i64: 16, 128>}, {pipeline_mode = #tpu.pipeline_mode<synchronous>, transform_indices = @transform_2, window_bounds = array<i64: 128, 128>}, {transform_indices = @transform_3, window_bounds = array<i64: 16, 128>}]} {
    %c0 = arith.constant 0 : index
    %c0_0 = arith.constant 0 : index
    %0 = vector.load %arg2[%c0, %c0_0] : memref<16x128xf32, #tpu.memory_space<vmem>>, vector<16x128xf32>
    %c0_1 = arith.constant 0 : index
    %c0_2 = arith.constant 0 : index
    %1 = vector.load %arg3[%c0_1, %c0_2] : memref<128x128xf32, #tpu.memory_space<vmem>>, vector<128x128xf32>
    %cst = arith.constant dense<0.000000e+00> : vector<16x128xf32>
    %2 = tpu.matmul %0, %1, %cst {dimension_numbers = #tpu.dot_dimension_numbers<[1], [0], [0], [1], [0, 0, 1, 1], [], []>} : vector<16x128xf32>, vector<128x128xf32>, vector<16x128xf32> -> vector<16x128xf32>
    %c0_3 = arith.constant 0 : index
    %c0_4 = arith.constant 0 : index
    %3 = vector.load %arg1[%c0_3, %c0_4] : memref<16x16xf32, #tpu.memory_space<vmem>>, vector<16x16xf32>
    %cst_5 = arith.constant 0.000000e+00 : f32
    %4 = vector.broadcast %cst_5 : f32 to vector<16x16xf32>
    %5 = arith.cmpf one, %3, %4 : vector<16x16xf32>
    %6 = arith.extui %5 : vector<16x16xi1> to vector<16x16xi32>
    %7 = arith.sitofp %6 : vector<16x16xi32> to vector<16x16xf32>
    %cst_6 = arith.constant dense<0.000000e+00> : vector<16xf32>
    %8 = vector.multi_reduction <add>, %7, %cst_6 [1] : vector<16x16xf32> to vector<16xf32>
    %9 = vector.shape_cast %8 : vector<16xf32> to vector<16x1xf32>
    %cst_7 = arith.constant 0.000000e+00 : f32
    %10 = vector.broadcast %cst_7 : f32 to vector<16x1xf32>
    %11 = arith.cmpf ogt, %9, %10 : vector<16x1xf32>
    %cst_8 = arith.constant 1.000000e+00 : f32
    %12 = vector.shape_cast %11 : vector<16x1xi1> to vector<16x1xi1>
    %13 = vector.broadcast %12 : vector<16x1xi1> to vector<16x16xi1>
    %14 = vector.broadcast %cst_8 : f32 to vector<16x16xf32>
    %15 = arith.select %13, %7, %14 : vector<16x16xi1>, vector<16x16xf32>
    %cst_9 = arith.constant 0.000000e+00 : f32
    %16 = vector.broadcast %cst_9 : f32 to vector<16x1xf32>
    %17 = arith.cmpf ogt, %9, %16 : vector<16x1xf32>
    %cst_10 = arith.constant 1.600000e+01 : f32
    %18 = vector.broadcast %cst_10 : f32 to vector<16x1xf32>
    %19 = arith.select %17, %9, %18 : vector<16x1xi1>, vector<16x1xf32>
    %cst_11 = arith.constant 1.000000e+00 : f32
    %20 = vector.broadcast %cst_11 : f32 to vector<16x1xf32>
    %21 = arith.divf %20, %19 : vector<16x1xf32>
    %22 = vector.broadcast %21 : vector<16x1xf32> to vector<16x16xf32>
    %23 = arith.mulf %15, %22 : vector<16x16xf32>
    %cst_12 = arith.constant dense<0.000000e+00> : vector<16x128xf32>
    %24 = tpu.matmul %23, %2, %cst_12 {dimension_numbers = #tpu.dot_dimension_numbers<[1], [0], [0], [1], [0, 0, 1, 1], [], []>} : vector<16x16xf32>, vector<16x128xf32>, vector<16x128xf32> -> vector<16x128xf32>
    %c0_13 = arith.constant 0 : index
    %c0_14 = arith.constant 0 : index
    %25 = vector.load %arg4[%c0_13, %c0_14] : memref<16x128xf32, #tpu.memory_space<vmem>>, vector<16x128xf32>
    tpu.vector_store %arg4[%c0_13, %c0_14], %24 {strides = array<i32>} : memref<16x128xf32, #tpu.memory_space<vmem>>, vector<16x128xf32>,
    return
  }
  func.func @transform_0(%arg0: i32) -> (i32, i32) {
    %c0_i32 = arith.constant 0 : i32
    %c0_i32_0 = arith.constant 0 : i32
    return %arg0, %c0_i32 : i32, i32
  }
  func.func @transform_1(%arg0: i32) -> (i32, i32) {
    %c0_i32 = arith.constant 0 : i32
    %c0_i32_0 = arith.constant 0 : i32
    %c0_i32_1 = arith.constant 0 : i32
    return %c0_i32, %c0_i32_0 : i32, i32
  }
  func.func @transform_2(%arg0: i32) -> (i32, i32) {
    %c0_i32 = arith.constant 0 : i32
    %c0_i32_0 = arith.constant 0 : i32
    %c0_i32_1 = arith.constant 0 : i32
    return %c0_i32, %c0_i32_0 : i32, i32
  }
  func.func @transform_3(%arg0: i32) -> (i32, i32) {
    %c0_i32 = arith.constant 0 : i32
    %c0_i32_0 = arith.constant 0 : i32
    return %arg0, %c0_i32 : i32, i32
  }
}

</mosaic_0001>

<llo_original>
// kernel: tpu_custom_call.1
$region0: #{tpu_custom_call.1}
  #allocation0 [shape = 'u32[]', space=smem, size = 0x4, offset = 0x4, fixed_abs, tag = 'smem constant byte address 0x4 - core index']
  #allocation1 [shape = 'u32[144,128]{1,0:T(1,128)}', space=vmem, size = 0x12000, scoped, tag = 'internal scratch']
  %s0 = inlined_call_operand.hbm [shape: f32[16,16], index: 0, kind: input, shape index: {}]
  %s1 = inlined_call_operand.hbm [shape: f32[16,128], index: 1, kind: input, shape index: {}]
  %s2 = inlined_call_operand.hbm [shape: f32[128,128], index: 2, kind: input, shape index: {}]
  %s3 = inlined_call_operand.hbm [shape: f32[16,128], index: 3, kind: output, shape index: {}]
  %s4 = sld [smem:[#allocation0]]
  $region34: #{tpu_custom_call.1} parent=0
    _
  %s6 = ssub.s32 1, %s4
  %s7 = scalar_select 0, %s6, %s4
  $region1: #{tpu_custom_call.1} parent=0
    #allocation2 [shape = 'u8[8192]{0}', space=vmem, size = 0x2000, scoped, tag = 'input window, operand 0, single buffered']
    #allocation3 [shape = 's32[1]{0}', space=sflag, size = 0x4, scoped, tag = 'scoped memory for tpu_custom_call.1']
    #allocation4 [shape = 's32[1]{0}', space=sflag, size = 0x4, scoped, tag = 'scoped memory for tpu_custom_call.1']
    #allocation5 [shape = 'u8[8192]{0}', space=vmem, size = 0x2000, scoped, tag = 'input window, operand 1, single buffered']
    #allocation6 [shape = 's32[1]{0}', space=sflag, size = 0x4, scoped, tag = 'scoped memory for tpu_custom_call.1']
    #allocation7 [shape = 'u8[65536]{0}', space=vmem, size = 0x10000, scoped, tag = 'input window, operand 2, single buffered']
    #allocation8 [shape = 'u8[8192]{0}', space=vmem, size = 0x2000, scoped, tag = 'output window, operand 0, single buffered']
    %8 = vsyncpa [#allocation3], 0
    %9 = vsyncpa [#allocation6], 0
    %10 = vsyncpa [#allocation4], 0
    // Predicated region
    $region2: #{tpu_custom_call.1} parent=1 // pred_check
      _
    $region3: #{tpu_custom_call.1} parent=1 // pred_check_branch
      %12 = sbr.rel (0) target = $region5
    $region4: #{tpu_custom_call.1} parent=1 // pred_region
      %s14 = ssub.s32 256, 256
      %15 = vsyncadd [#allocation3], %s14
      %s16 = sshll.u32 [#allocation2], 4
      %s17 = int_to_ptr.vmem [resolvable:$true] %s16
      %22 = dma.hbm_to_vmem [thread:$0]  %s0, 256, %s17, [#allocation3], 128, 128, 8
    $region5: #{tpu_custom_call.1} parent=1 // pred_fallthru
      _
    // Predicated region
    $region6: #{tpu_custom_call.1} parent=1 // pred_check
      _
    $region7: #{tpu_custom_call.1} parent=1 // pred_check_branch
      %24 = sbr.rel (0) target = $region9
    $region8: #{tpu_custom_call.1} parent=1 // pred_region
      %s26 = ssub.s32 256, 256
      %27 = vsyncadd [#allocation6], %s26
      %s28 = sshll.u32 [#allocation5], 4
      %s29 = int_to_ptr.vmem [resolvable:$true] %s28
      %34 = dma.hbm_to_vmem [thread:$0]  %s1, 256, %s29, [#allocation6], 128, 128, 8
    $region9: #{tpu_custom_call.1} parent=1 // pred_fallthru
      _
    // Predicated region
    $region10: #{tpu_custom_call.1} parent=1 // pred_check
      _
    $region11: #{tpu_custom_call.1} parent=1 // pred_check_branch
      %36 = sbr.rel (0) target = $region13
    $region12: #{tpu_custom_call.1} parent=1 // pred_region
      %s38 = ssub.s32 2048, 2048
      %39 = vsyncadd [#allocation6], %s38
      %s40 = sshll.u32 [#allocation7], 4
      %s41 = int_to_ptr.vmem [resolvable:$true] %s40
      %46 = dma.hbm_to_vmem [thread:$0]  %s2, 2048, %s41, [#allocation6], 128, 128, 8
    $region13: #{tpu_custom_call.1} parent=1 // pred_fallthru
      _
    // Predicated region
    $region14: #{tpu_custom_call.1} parent=1 // pred_check
      _
    $region15: #{tpu_custom_call.1} parent=1 // pred_check_branch
      %48 = sbr.rel (0) target = $region17
    $region16: #{tpu_custom_call.1} parent=1 // pred_region
      %49 = dma.done [#allocation3], 256
    $region17: #{tpu_custom_call.1} parent=1 // pred_fallthru
      _
    // Predicated region
    $region18: #{tpu_custom_call.1} parent=1 // pred_check
      _
    $region19: #{tpu_custom_call.1} parent=1 // pred_check_branch
      %51 = sbr.rel (0) target = $region21
    $region20: #{tpu_custom_call.1} parent=1 // pred_region
      %52 = dma.done [#allocation6], 256
    $region21: #{tpu_custom_call.1} parent=1 // pred_fallthru
      _
    // Predicated region
    $region22: #{tpu_custom_call.1} parent=1 // pred_check
      _
    $region23: #{tpu_custom_call.1} parent=1 // pred_check_branch
      %54 = sbr.rel (0) target = $region25
    $region24: #{tpu_custom_call.1} parent=1 // pred_region
      %55 = dma.done [#allocation6], 2048
    $region25: #{tpu_custom_call.1} parent=1 // pred_fallthru
      _
    %v56 = vld [vmem:[#allocation5] sm:$0xff]
    %v57 = vld [vmem:[#allocation5 + $0x8] sm:$0xff]
    %v58 = vld [vmem:[#allocation7] sm:$0xff]
    %v59 = vld [vmem:[#allocation7 + $0x8] sm:$0xff]
    %v60 = vld [vmem:[#allocation7 + $0x10] sm:$0xff]
    %v61 = vld [vmem:[#allocation7 + $0x18] sm:$0xff]
    %v62 = vld [vmem:[#allocation7 + $0x20] sm:$0xff]
    %v63 = vld [vmem:[#allocation7 + $0x28] sm:$0xff]
    %v64 = vld [vmem:[#allocation7 + $0x30] sm:$0xff]
    %v65 = vld [vmem:[#allocation7 + $0x38] sm:$0xff]
    %v66 = vld [vmem:[#allocation7 + $0x40] sm:$0xff]
    %v67 = vld [vmem:[#allocation7 + $0x48] sm:$0xff]
    %v68 = vld [vmem:[#allocation7 + $0x50] sm:$0xff]
    %v69 = vld [vmem:[#allocation7 + $0x58] sm:$0xff]
    %v70 = vld [vmem:[#allocation7 + $0x60] sm:$0xff]
    %v71 = vld [vmem:[#allocation7 + $0x68] sm:$0xff]
    %v72 = vld [vmem:[#allocation7 + $0x70] sm:$0xff]
    %v73 = vld [vmem:[#allocation7 + $0x78] sm:$0xff]
    %74 = vmatprep.subr.mxu0 0.0
    %75 = vmatpush1.msra.mxu0 %v73
    %76 = vmatprep.subr.mxu0 0.0
    %77 = vmatpush1.msra.mxu0 %v72
    %78 = vmatprep.subr.mxu0 0.0
    %79 = vmatpush1.msra.mxu0 %v71
    %80 = vmatprep.subr.mxu0 0.0
    %81 = vmatpush1.msra.mxu0 %v70
    %82 = vmatprep.subr.mxu0 0.0
    %83 = vmatpush1.msra.mxu0 %v69
    %84 = vmatprep.subr.mxu0 0.0
    %85 = vmatpush1.msra.mxu0 %v68
    %86 = vmatprep.subr.mxu0 0.0
    %87 = vmatpush1.msra.mxu0 %v67
    %88 = vmatprep.subr.mxu0 0.0
    %89 = vmatpush1.msra.mxu0 %v66
    %90 = vmatprep.subr.mxu0 0.0
    %91 = vmatpush1.msra.mxu0 %v65
    %92 = vmatprep.subr.mxu0 0.0
    %93 = vmatpush1.msra.mxu0 %v64
    %94 = vmatprep.subr.mxu0 0.0
    %95 = vmatpush1.msra.mxu0 %v63
    %96 = vmatprep.subr.mxu0 0.0
    %97 = vmatpush1.msra.mxu0 %v62
    %98 = vmatprep.subr.mxu0 0.0
    %99 = vmatpush1.msra.mxu0 %v61
    %100 = vmatprep.subr.mxu0 0.0
    %101 = vmatpush1.msra.mxu0 %v60
    %102 = vmatprep.subr.mxu0 0.0
    %103 = vmatpush1.msra.mxu0 %v59
    %104 = vmatprep.subr.mxu0 0.0
    %105 = vmatpush1.msra.mxu0 %v58
    %106 = vmatprep.subr.mxu0 0.0
    %107 = vmatpush2.msra.mxu0 0.0
    %108 = vmatprep.subr.mxu0 0.0
    %109 = vmatpush2.msra.mxu0 0.0
    %110 = vmatprep.subr.mxu0 0.0
    %111 = vmatpush2.msra.mxu0 0.0
    %112 = vmatprep.subr.mxu0 0.0
    %113 = vmatpush2.msra.mxu0 0.0
    %114 = vmatprep.subr.mxu0 0.0
    %115 = vmatpush2.msra.mxu0 0.0
    %116 = vmatprep.subr.mxu0 0.0
    %117 = vmatpush2.msra.mxu0 0.0
    %118 = vmatprep.subr.mxu0 0.0
    %119 = vmatpush2.msra.mxu0 0.0
    %120 = vmatprep.subr.mxu0 0.0
    %121 = vmatpush2.msra.mxu0 0.0
    %122 = vmatprep.subr.mxu0 0.0
    %123 = vmatpush2.msra.mxu0 0.0
    %124 = vmatprep.subr.mxu0 0.0
    %125 = vmatpush2.msra.mxu0 0.0
    %126 = vmatprep.subr.mxu0 0.0
    %127 = vmatpush2.msra.mxu0 0.0
    %128 = vmatprep.subr.mxu0 0.0
    %129 = vmatpush2.msra.mxu0 0.0
    %130 = vmatprep.subr.mxu0 0.0
    %131 = vmatpush2.msra.mxu0 0.0
    %132 = vmatprep.subr.mxu0 0.0
    %133 = vmatpush2.msra.mxu0 0.0
    %134 = vmatprep.subr.mxu0 0.0
    %135 = vmatpush2.msra.mxu0 0.0
    %136 = vmatprep.subr.mxu0 0.0
    %137 = vmatpush2.msra.mxu0 0.0
    %138 = vmatprep.mubr.f32.mxu0 0.0
    %139 = vmatmul.mubr.f32.gmra.mxu0 %v56
    %v140 = vpop.f32.mrf.mxu0
    %v141 = vadd.f32 0.0, %v140
    %v142 = vpop.f32.mrf.mxu0
    %143 = vmatprep.mubr.f32.mxu0 0.0
    %144 = vmatmul.mubr.f32.gmra.mxu0 %v57
    %v145 = vpop.f32.mrf.mxu0
    %v146 = vadd.f32 0.0, %v145
    %v147 = vpop.f32.mrf.mxu0
    %148 = vdwg.mxu0
    %v149 = vld [vmem:[#allocation2] sm:$0xff]
    %v150 = vld [vmem:[#allocation2 + $0x8] sm:$0xff]
    %vm151 = vcmp.ne.f32.partialorder %v149, 0.0
    %vm152 = vcmp.ne.f32.partialorder %v150, 0.0
    %v153 = vsel %vm151, 1, 0
    %v154 = vsel %vm152, 1, 0
    %v155 = vcvt.s32.f32 %v153
    %v156 = vcvt.s32.f32 %v154
    %vm157 = vcmask 130048
    %v158 = vsel %vm157, %v155, 0.0
    %159 = vadd.xlane.f32.xlu0 %v158
    %v160 = vpop.xlane.xlu0 %159
    %v161 = vsel %vm157, %v156, 0.0
    %162 = vadd.xlane.f32.xlu0 %v161
    %v163 = vpop.xlane.xlu0 %162
    %vm164 = vcmp.gt.f32.partialorder %v160, 0.0
    %vm165 = vcmp.gt.f32.partialorder %v163, 0.0
    %v166 = vsel %vm164, 1, 0
    %v167 = vsel %vm165, 1, 0
    %vm168 = vcmp.eq.s32.totalorder %v166, 1
    %vm169 = vcmp.eq.s32.totalorder %v167, 1
    %v170 = vsel %vm168, %v155, 1.0
    %v171 = vsel %vm169, %v156, 1.0
    %v172 = vsel %vm164, %v160, 16.0
    %v173 = vsel %vm165, %v163, 16.0
    %v174 = vrcp.pop %v172
    %v175 = vmul.f32 1.0, %v174
    %v176 = vrcp.pop %v173
    %v177 = vmul.f32 1.0, %v176
    %v178 = vmul.f32 %v170, %v175
    %v179 = vmul.f32 %v171, %v177
    %v181 = vsel %vm157, %v178, 0
    %v184 = vsel %vm157, %v179, 0
    %186 = vmatprep.subr.mxu0 0.0
    %187 = vmatpush1.msra.mxu0 0.0
    %188 = vmatprep.subr.mxu0 0.0
    %189 = vmatpush1.msra.mxu0 0.0
    %190 = vmatprep.subr.mxu0 0.0
    %191 = vmatpush1.msra.mxu0 0.0
    %192 = vmatprep.subr.mxu0 0.0
    %193 = vmatpush1.msra.mxu0 0.0
    %194 = vmatprep.subr.mxu0 0.0
    %195 = vmatpush1.msra.mxu0 0.0
    %196 = vmatprep.subr.mxu0 0.0
    %197 = vmatpush1.msra.mxu0 0.0
    %198 = vmatprep.subr.mxu0 0.0
    %199 = vmatpush1.msra.mxu0 0.0
    %200 = vmatprep.subr.mxu0 0.0
    %201 = vmatpush1.msra.mxu0 0.0
    %202 = vmatprep.subr.mxu0 0.0
    %203 = vmatpush1.msra.mxu0 0.0
    %204 = vmatprep.subr.mxu0 0.0
    %205 = vmatpush1.msra.mxu0 0.0
    %206 = vmatprep.subr.mxu0 0.0
    %207 = vmatpush1.msra.mxu0 0.0
    %208 = vmatprep.subr.mxu0 0.0
    %209 = vmatpush1.msra.mxu0 0.0
    %210 = vmatprep.subr.mxu0 0.0
    %211 = vmatpush1.msra.mxu0 0.0
    %212 = vmatprep.subr.mxu0 0.0
    %213 = vmatpush1.msra.mxu0 0.0
    %214 = vmatprep.subr.mxu0 0.0
    %215 = vmatpush1.msra.mxu0 %v146
    %216 = vmatprep.subr.mxu0 0.0
    %217 = vmatpush1.msra.mxu0 %v141
    %218 = vmatprep.subr.mxu0 0.0
    %219 = vmatpush2.msra.mxu0 0.0
    %220 = vmatprep.subr.mxu0 0.0
    %221 = vmatpush2.msra.mxu0 0.0
    %222 = vmatprep.subr.mxu0 0.0
    %223 = vmatpush2.msra.mxu0 0.0
    %224 = vmatprep.subr.mxu0 0.0
    %225 = vmatpush2.msra.mxu0 0.0
    %226 = vmatprep.subr.mxu0 0.0
    %227 = vmatpush2.msra.mxu0 0.0
    %228 = vmatprep.subr.mxu0 0.0
    %229 = vmatpush2.msra.mxu0 0.0
    %230 = vmatprep.subr.mxu0 0.0
    %231 = vmatpush2.msra.mxu0 0.0
    %232 = vmatprep.subr.mxu0 0.0
    %233 = vmatpush2.msra.mxu0 0.0
    %234 = vmatprep.subr.mxu0 0.0
    %235 = vmatpush2.msra.mxu0 0.0
    %236 = vmatprep.subr.mxu0 0.0
    %237 = vmatpush2.msra.mxu0 0.0
    %238 = vmatprep.subr.mxu0 0.0
    %239 = vmatpush2.msra.mxu0 0.0
    %240 = vmatprep.subr.mxu0 0.0
    %241 = vmatpush2.msra.mxu0 0.0
    %242 = vmatprep.subr.mxu0 0.0
    %243 = vmatpush2.msra.mxu0 0.0
    %244 = vmatprep.subr.mxu0 0.0
    %245 = vmatpush2.msra.mxu0 0.0
    %246 = vmatprep.subr.mxu0 0.0
    %247 = vmatpush2.msra.mxu0 0.0
    %248 = vmatprep.subr.mxu0 0.0
    %249 = vmatpush2.msra.mxu0 0.0
    %250 = vmatprep.mubr.f32.mxu0 0.0
    %251 = vmatmul.mubr.f32.gmra.mxu0 %v181
    %v252 = vpop.f32.mrf.mxu0
    %v253 = vadd.f32 0.0, %v252
    %v254 = vpop.f32.mrf.mxu0
    %255 = vmatprep.mubr.f32.mxu0 0.0
    %256 = vmatmul.mubr.f32.gmra.mxu0 %v184
    %v257 = vpop.f32.mrf.mxu0
    %v258 = vadd.f32 0.0, %v257
    %v259 = vpop.f32.mrf.mxu0
    %260 = vdwg.mxu0
    %261 = vst [vmem:[#allocation8] sm:$0xff] %v253
    %262 = vst [vmem:[#allocation8 + $0x8] sm:$0xff] %v258
    // Predicated region
    $region26: #{tpu_custom_call.1} parent=1 // pred_check
      _
    $region27: #{tpu_custom_call.1} parent=1 // pred_check_branch
      %264 = sbr.rel (0) target = $region29
    $region28: #{tpu_custom_call.1} parent=1 // pred_region
      %s266 = ssub.s32 256, 256
      %267 = vsyncadd [#allocation4], %s266
      %s268 = sshll.u32 [#allocation8], 4
      %s269 = int_to_ptr.vmem [resolvable:$true] %s268
      %274 = dma.vmem_to_hbm [thread:$0]  %s269, 256, %s3, [#allocation4], 128, 128, 8
    $region29: #{tpu_custom_call.1} parent=1 // pred_fallthru
      _
    // Predicated region
    $region30: #{tpu_custom_call.1} parent=1 // pred_check
      _
    $region31: #{tpu_custom_call.1} parent=1 // pred_check_branch
      %276 = sbr.rel (0) target = $region33
    $region32: #{tpu_custom_call.1} parent=1 // pred_region
      %277 = dma.done [#allocation4], 256
    $region33: #{tpu_custom_call.1} parent=1 // pred_fallthru
      _
    %278 = vsyncpa [#allocation3], 1
    %279 = vsyncpa [#allocation6], 1
    %280 = vsyncpa [#allocation4], 1

</llo_original>
